<compile_context>
chip_gen: v7x
topology: tpu7x:2x2x1
jax: 0.10.0
libtpu: 0.0.40
codegen_flags: <defaults>
</compile_context>

<pallas_src>
import jax
import jax.numpy as jnp
from jax import lax
from jax.experimental import pallas as pl
from jax.experimental.pallas import tpu as pltpu


# Cap on channels fused per grid step (the per-channel compute is statically
# unrolled inside the kernel).
_MAX_CHANNEL_UNROLL = 32


def _vmem_capacity_bytes():
    """Per-core VMEM capacity; conservative 64 MiB fallback if the query fails."""
    try:
        info = pltpu.get_tpu_info()
        cap = getattr(info, "vmem_capacity_bytes", None)
        if cap:
            return int(cap)
    except Exception:
        pass
    return 64 << 20


def _make_kernel(*, NC, kc, H, W, use_roll, ragged):
    """Kernel body for an input block of shape (kc, H, W) -> (1, 1) SMEM sum."""

    def kernel(x_ref, out_ref):
        if ragged:
            c0 = pl.program_id(0) * kc  # first flattened (n*c) row of this block

        if use_roll:
            # Hoisted once per grid step: interior mask excluding the wrap row
            # and column produced by the rolls.
            row = lax.broadcasted_iota(jnp.int32, (H, W), 0)
            col = lax.broadcasted_iota(jnp.int32, (H, W), 1)
            interior = (row < H - 1) & (col < W - 1)

        total = jnp.float32(0.0)
        for c in range(kc):  # static unroll; kc <= _MAX_CHANNEL_UNROLL
            # Cast to f32 right after the load: matches the reference math and
            # avoids bf16 VALU emulation on v5e.  HBM traffic stays in the
            # original input dtype.
            xc = x_ref[c].astype(jnp.float32)          # (H, W)
            if use_roll:
                # Full-tile shifted neighbours on the XLU; wrap rows/cols masked.
                down = pltpu.roll(xc, H - 1, axis=0)   # xc[(h+1) % H, w]
                right = pltpu.roll(xc, W - 1, axis=1)  # xc[h, (w+1) % W]
                s = jnp.abs(down - xc) + jnp.abs(right - xc)
                s = jnp.where(interior, s, 0.0)
            else:
                # Fallback for lane/sublane-unaligned H, W: interior-aligned
                # shifted views (known-good lowering for arbitrary shapes).
                base = xc[:-1, :-1]    # x[h,   w  ]
                down = xc[1:, :-1]     # x[h+1, w  ]
                right = xc[:-1, 1:]    # x[h,   w+1]
                s = jnp.abs(down - base) + jnp.abs(right - base)
            part = jnp.sum(s * s)
            if ragged:
                # Ragged last block: zero the contribution of padded rows.
                part = jnp.where(c0 + c < NC, part, jnp.float32(0.0))
            total = total + part
        out_ref[0, 0] = total

    return kernel


def illumination_smoothness_loss(alphas, *, core_parallel=False):
    """alphas: (N, C, H, W) array. Returns the scalar float32 loss."""
    N, C, H, W = alphas.shape
    if H < 2 or W < 2:
        # mean over an empty (H-1) x (W-1) grid -> NaN, matching the reference.
        return jnp.full((), jnp.nan, dtype=jnp.float32)

    NC = N * C
    x = alphas.reshape(NC, H, W)  # free collapse of the two leading dims
    itemsize = jnp.dtype(alphas.dtype).itemsize

    # ---- generation-aware tiling --------------------------------------------
    vmem_cap = _vmem_capacity_bytes()              # 128 MiB v5e/v6e, 64 MiB/TC v7x
    budget = min((vmem_cap * 2) // 5, 40 << 20)    # total in-flight VMEM target
    per_chan_in = H * W * itemsize
    per_chan_f32 = H * W * 4
    slack = 1 << 20
    # VMEM model: double-buffered input block + ~4 per-channel f32 temporaries.
    kc_budget = (budget - slack - 4 * per_chan_f32) // max(2 * per_chan_in, 1)
    kc = int(max(1, min(kc_budget, NC, _MAX_CHANNEL_UNROLL)))
    num_blocks = pl.cdiv(NC, kc)
    ragged = (NC % kc) != 0

    # Roll path only where the f32 rotate lowering is unconditionally safe.
    use_roll = (H % 8 == 0) and (W % 128 == 0)

    compiler_kwargs = {}
    # "parallel" vs "arbitrary" is measured-neutral; CORE_PARALLEL is what
    # actually shards the grid across v7x's two TensorCores.  Opt-in so the
    # default stays portable across generations.
    compiler_kwargs["dimension_semantics"] = (
        (pltpu.CORE_PARALLEL,) if core_parallel else ("parallel",)
    )
    vmem_needed = 2 * kc * per_chan_in + 4 * per_chan_f32 + slack
    if vmem_needed > (14 << 20):
        # v5e's scoped-VMEM default is only 16 MiB; set the limit explicitly,
        # capped to ~90% of the current generation's per-core capacity.
        compiler_kwargs["vmem_limit_bytes"] = int(
            min(max(vmem_needed, 16 << 20), (vmem_cap * 9) // 10)
        )
        # TODO(synk): single-channel slabs too large even for ~0.9*VMEM
        # (e.g. 4K f32 imagery) need an H-tiling grid axis with a 1-row halo.

    kernel = _make_kernel(NC=NC, kc=kc, H=H, W=W, use_roll=use_roll, ragged=ragged)

    partials = pl.pallas_call(
        kernel,
        out_shape=jax.ShapeDtypeStruct((num_blocks, 1), jnp.float32),
        grid_spec=pltpu.PrefetchScalarGridSpec(
            num_scalar_prefetch=0,
            grid=(num_blocks,),
            in_specs=[
                # (kc, H, W): the last two dims equal the full array dims, so
                # the (8, 128) block constraint is satisfied for any H, W.
                pl.BlockSpec((kc, H, W), lambda i: (i, 0, 0)),
            ],
            # Each grid step owns its own (1, 1) partial-sum block: no serial
            # read-modify-write chain across grid steps.
            out_specs=pl.BlockSpec(
                (1, 1), lambda i: (i, 0), memory_space=pltpu.SMEM
            ),
        ),
        compiler_params=pltpu.CompilerParams(**compiler_kwargs),
    )(x)

    denom = jnp.float32(N * C * (H - 1) * (W - 1))
    return (jnp.sum(partials) / denom).astype(jnp.float32)


def _reference(alphas):
    x = alphas.astype(jnp.float32)
    grad_h = jnp.abs(x[:, :, 1:, :] - x[:, :, :-1, :])
    grad_v = jnp.abs(x[:, :, :, 1:] - x[:, :, :, :-1])
    per = jnp.mean((grad_h[:, :, :, :-1] + grad_v[:, :, :-1, :]) ** 2, axis=(2, 3))
    return jnp.mean(per)


if __name__ == "__main__":
    key = jax.random.PRNGKey(0)
    k1, k2, k3, k4 = jax.random.split(key, 4)

    cases = [
        # Canonical small NCHW input (unaligned spatial dims -> sliced fallback).
        jax.random.uniform(k1, (2, 4, 16, 16), dtype=jnp.float32),
        # Lane/sublane-aligned spatial dims -> exercises the roll+mask path.
        jax.random.uniform(k2, (2, 4, 16, 128), dtype=jnp.float32),
        # 24 channels (DCE-Net curve maps): NC=48 > unroll cap -> ragged block.
        jax.random.uniform(k3, (2, 24, 16, 16), dtype=jnp.float32),
        # bf16 input: DMA stays bf16, math is f32 in-kernel.
        jax.random.uniform(k4, (2, 3, 16, 16)).astype(jnp.bfloat16),
    ]
    for a in cases:
        got = jax.block_until_ready(illumination_smoothness_loss(a))
        want = jax.block_until_ready(_reference(a))
        assert jnp.allclose(got, want, rtol=1e-5, atol=1e-6), (a.shape, got, want)

    print("KERNEL_OK")
</pallas_src>

<mosaic_0001>
module attributes {stable_mosaic.version = 11 : i64} {
  func.func @kernel(%arg0: i32, %arg1: memref<8x16x16xf32, #tpu.memory_space<vmem>>, %arg2: memref<1x1xf32, #tpu.memory_space<smem>>) attributes {dimension_semantics = [#tpu.dimension_semantics<parallel>], iteration_bounds = array<i64: 1>, scalar_prefetch = 0 : i64, scratch_operands = 0 : i64, tpu.core_type = #tpu.core_type<tc>, window_params = [{transform_indices = @transform_0, window_bounds = array<i64: 8, 16, 16>}, {transform_indices = @transform_1, window_bounds = array<i64: 1, 1>}]} {
    %c0 = arith.constant 0 : index
    %c0_0 = arith.constant 0 : index
    %c0_1 = arith.constant 0 : index
    %0 = vector.load %arg1[%c0, %c0_0, %c0_1] : memref<8x16x16xf32, #tpu.memory_space<vmem>>, vector<1x16x16xf32>
    %1 = vector.shape_cast %0 : vector<1x16x16xf32> to vector<16x16xf32>
    %2 = vector.extract_strided_slice %1 {offsets = [0, 0], sizes = [15, 15], strides = [1, 1]} : vector<16x16xf32> to vector<15x15xf32>
    %3 = vector.extract_strided_slice %1 {offsets = [1, 0], sizes = [15, 15], strides = [1, 1]} : vector<16x16xf32> to vector<15x15xf32>
    %4 = vector.extract_strided_slice %1 {offsets = [0, 1], sizes = [15, 15], strides = [1, 1]} : vector<16x16xf32> to vector<15x15xf32>
    %5 = arith.subf %3, %2 : vector<15x15xf32>
    %6 = math.absf %5 : vector<15x15xf32>
    %7 = arith.subf %4, %2 : vector<15x15xf32>
    %8 = math.absf %7 : vector<15x15xf32>
    %9 = arith.addf %6, %8 : vector<15x15xf32>
    %10 = arith.mulf %9, %9 : vector<15x15xf32>
    %11 = vector.shape_cast %10 : vector<15x15xf32> to vector<1x15x15xf32>
    %cst = arith.constant dense<0.000000e+00> : vector<1xf32>
    %12 = vector.multi_reduction <add>, %11, %cst [1, 2] : vector<1x15x15xf32> to vector<1xf32>
    %13 = vector.shape_cast %12 : vector<1xf32> to vector<1x1x1xf32>
    %14 = vector.extract %13[0, 0, 0] : f32 from vector<1x1x1xf32>
    %cst_2 = arith.constant 0.000000e+00 : f32
    %15 = arith.addf %cst_2, %14 : f32
    %c1 = arith.constant 1 : index
    %c0_3 = arith.constant 0 : index
    %c0_4 = arith.constant 0 : index
    %16 = vector.load %arg1[%c1, %c0_3, %c0_4] : memref<8x16x16xf32, #tpu.memory_space<vmem>>, vector<1x16x16xf32>
    %17 = vector.shape_cast %16 : vector<1x16x16xf32> to vector<16x16xf32>
    %18 = vector.extract_strided_slice %17 {offsets = [0, 0], sizes = [15, 15], strides = [1, 1]} : vector<16x16xf32> to vector<15x15xf32>
    %19 = vector.extract_strided_slice %17 {offsets = [1, 0], sizes = [15, 15], strides = [1, 1]} : vector<16x16xf32> to vector<15x15xf32>
    %20 = vector.extract_strided_slice %17 {offsets = [0, 1], sizes = [15, 15], strides = [1, 1]} : vector<16x16xf32> to vector<15x15xf32>
    %21 = arith.subf %19, %18 : vector<15x15xf32>
    %22 = math.absf %21 : vector<15x15xf32>
    %23 = arith.subf %20, %18 : vector<15x15xf32>
    %24 = math.absf %23 : vector<15x15xf32>
    %25 = arith.addf %22, %24 : vector<15x15xf32>
    %26 = arith.mulf %25, %25 : vector<15x15xf32>
    %27 = vector.shape_cast %26 : vector<15x15xf32> to vector<1x15x15xf32>
    %cst_5 = arith.constant dense<0.000000e+00> : vector<1xf32>
    %28 = vector.multi_reduction <add>, %27, %cst_5 [1, 2] : vector<1x15x15xf32> to vector<1xf32>
    %29 = vector.shape_cast %28 : vector<1xf32> to vector<1x1x1xf32>
    %30 = vector.extract %29[0, 0, 0] : f32 from vector<1x1x1xf32>
    %31 = arith.addf %15, %30 : f32
    %c2 = arith.constant 2 : index
    %c0_6 = arith.constant 0 : index
    %c0_7 = arith.constant 0 : index
    %32 = vector.load %arg1[%c2, %c0_6, %c0_7] : memref<8x16x16xf32, #tpu.memory_space<vmem>>, vector<1x16x16xf32>
    %33 = vector.shape_cast %32 : vector<1x16x16xf32> to vector<16x16xf32>
    %34 = vector.extract_strided_slice %33 {offsets = [0, 0], sizes = [15, 15], strides = [1, 1]} : vector<16x16xf32> to vector<15x15xf32>
    %35 = vector.extract_strided_slice %33 {offsets = [1, 0], sizes = [15, 15], strides = [1, 1]} : vector<16x16xf32> to vector<15x15xf32>
    %36 = vector.extract_strided_slice %33 {offsets = [0, 1], sizes = [15, 15], strides = [1, 1]} : vector<16x16xf32> to vector<15x15xf32>
    %37 = arith.subf %35, %34 : vector<15x15xf32>
    %38 = math.absf %37 : vector<15x15xf32>
    %39 = arith.subf %36, %34 : vector<15x15xf32>
    %40 = math.absf %39 : vector<15x15xf32>
    %41 = arith.addf %38, %40 : vector<15x15xf32>
    %42 = arith.mulf %41, %41 : vector<15x15xf32>
    %43 = vector.shape_cast %42 : vector<15x15xf32> to vector<1x15x15xf32>
    %cst_8 = arith.constant dense<0.000000e+00> : vector<1xf32>
    %44 = vector.multi_reduction <add>, %43, %cst_8 [1, 2] : vector<1x15x15xf32> to vector<1xf32>
    %45 = vector.shape_cast %44 : vector<1xf32> to vector<1x1x1xf32>
    %46 = vector.extract %45[0, 0, 0] : f32 from vector<1x1x1xf32>
    %47 = arith.addf %31, %46 : f32
    %c3 = arith.constant 3 : index
    %c0_9 = arith.constant 0 : index
    %c0_10 = arith.constant 0 : index
    %48 = vector.load %arg1[%c3, %c0_9, %c0_10] : memref<8x16x16xf32, #tpu.memory_space<vmem>>, vector<1x16x16xf32>
    %49 = vector.shape_cast %48 : vector<1x16x16xf32> to vector<16x16xf32>
    %50 = vector.extract_strided_slice %49 {offsets = [0, 0], sizes = [15, 15], strides = [1, 1]} : vector<16x16xf32> to vector<15x15xf32>
    %51 = vector.extract_strided_slice %49 {offsets = [1, 0], sizes = [15, 15], strides = [1, 1]} : vector<16x16xf32> to vector<15x15xf32>
    %52 = vector.extract_strided_slice %49 {offsets = [0, 1], sizes = [15, 15], strides = [1, 1]} : vector<16x16xf32> to vector<15x15xf32>
    %53 = arith.subf %51, %50 : vector<15x15xf32>
    %54 = math.absf %53 : vector<15x15xf32>
    %55 = arith.subf %52, %50 : vector<15x15xf32>
    %56 = math.absf %55 : vector<15x15xf32>
    %57 = arith.addf %54, %56 : vector<15x15xf32>
    %58 = arith.mulf %57, %57 : vector<15x15xf32>
    %59 = vector.shape_cast %58 : vector<15x15xf32> to vector<1x15x15xf32>
    %cst_11 = arith.constant dense<0.000000e+00> : vector<1xf32>
    %60 = vector.multi_reduction <add>, %59, %cst_11 [1, 2] : vector<1x15x15xf32> to vector<1xf32>
    %61 = vector.shape_cast %60 : vector<1xf32> to vector<1x1x1xf32>
    %62 = vector.extract %61[0, 0, 0] : f32 from vector<1x1x1xf32>
    %63 = arith.addf %47, %62 : f32
    %c4 = arith.constant 4 : index
    %c0_12 = arith.constant 0 : index
    %c0_13 = arith.constant 0 : index
    %64 = vector.load %arg1[%c4, %c0_12, %c0_13] : memref<8x16x16xf32, #tpu.memory_space<vmem>>, vector<1x16x16xf32>
    %65 = vector.shape_cast %64 : vector<1x16x16xf32> to vector<16x16xf32>
    %66 = vector.extract_strided_slice %65 {offsets = [0, 0], sizes = [15, 15], strides = [1, 1]} : vector<16x16xf32> to vector<15x15xf32>
    %67 = vector.extract_strided_slice %65 {offsets = [1, 0], sizes = [15, 15], strides = [1, 1]} : vector<16x16xf32> to vector<15x15xf32>
    %68 = vector.extract_strided_slice %65 {offsets = [0, 1], sizes = [15, 15], strides = [1, 1]} : vector<16x16xf32> to vector<15x15xf32>
    %69 = arith.subf %67, %66 : vector<15x15xf32>
    %70 = math.absf %69 : vector<15x15xf32>
    %71 = arith.subf %68, %66 : vector<15x15xf32>
    %72 = math.absf %71 : vector<15x15xf32>
    %73 = arith.addf %70, %72 : vector<15x15xf32>
    %74 = arith.mulf %73, %73 : vector<15x15xf32>
    %75 = vector.shape_cast %74 : vector<15x15xf32> to vector<1x15x15xf32>
    %cst_14 = arith.constant dense<0.000000e+00> : vector<1xf32>
    %76 = vector.multi_reduction <add>, %75, %cst_14 [1, 2] : vector<1x15x15xf32> to vector<1xf32>
    %77 = vector.shape_cast %76 : vector<1xf32> to vector<1x1x1xf32>
    %78 = vector.extract %77[0, 0, 0] : f32 from vector<1x1x1xf32>
    %79 = arith.addf %63, %78 : f32
    %c5 = arith.constant 5 : index
    %c0_15 = arith.constant 0 : index
    %c0_16 = arith.constant 0 : index
    %80 = vector.load %arg1[%c5, %c0_15, %c0_16] : memref<8x16x16xf32, #tpu.memory_space<vmem>>, vector<1x16x16xf32>
    %81 = vector.shape_cast %80 : vector<1x16x16xf32> to vector<16x16xf32>
    %82 = vector.extract_strided_slice %81 {offsets = [0, 0], sizes = [15, 15], strides = [1, 1]} : vector<16x16xf32> to vector<15x15xf32>
    %83 = vector.extract_strided_slice %81 {offsets = [1, 0], sizes = [15, 15], strides = [1, 1]} : vector<16x16xf32> to vector<15x15xf32>
    %84 = vector.extract_strided_slice %81 {offsets = [0, 1], sizes = [15, 15], strides = [1, 1]} : vector<16x16xf32> to vector<15x15xf32>
    %85 = arith.subf %83, %82 : vector<15x15xf32>
    %86 = math.absf %85 : vector<15x15xf32>
    %87 = arith.subf %84, %82 : vector<15x15xf32>
    %88 = math.absf %87 : vector<15x15xf32>
    %89 = arith.addf %86, %88 : vector<15x15xf32>
    %90 = arith.mulf %89, %89 : vector<15x15xf32>
    %91 = vector.shape_cast %90 : vector<15x15xf32> to vector<1x15x15xf32>
    %cst_17 = arith.constant dense<0.000000e+00> : vector<1xf32>
    %92 = vector.multi_reduction <add>, %91, %cst_17 [1, 2] : vector<1x15x15xf32> to vector<1xf32>
    %93 = vector.shape_cast %92 : vector<1xf32> to vector<1x1x1xf32>
    %94 = vector.extract %93[0, 0, 0] : f32 from vector<1x1x1xf32>
    %95 = arith.addf %79, %94 : f32
    %c6 = arith.constant 6 : index
    %c0_18 = arith.constant 0 : index
    %c0_19 = arith.constant 0 : index
    %96 = vector.load %arg1[%c6, %c0_18, %c0_19] : memref<8x16x16xf32, #tpu.memory_space<vmem>>, vector<1x16x16xf32>
    %97 = vector.shape_cast %96 : vector<1x16x16xf32> to vector<16x16xf32>
    %98 = vector.extract_strided_slice %97 {offsets = [0, 0], sizes = [15, 15], strides = [1, 1]} : vector<16x16xf32> to vector<15x15xf32>
    %99 = vector.extract_strided_slice %97 {offsets = [1, 0], sizes = [15, 15], strides = [1, 1]} : vector<16x16xf32> to vector<15x15xf32>
    %100 = vector.extract_strided_slice %97 {offsets = [0, 1], sizes = [15, 15], strides = [1, 1]} : vector<16x16xf32> to vector<15x15xf32>
    %101 = arith.subf %99, %98 : vector<15x15xf32>
    %102 = math.absf %101 : vector<15x15xf32>
    %103 = arith.subf %100, %98 : vector<15x15xf32>
    %104 = math.absf %103 : vector<15x15xf32>
    %105 = arith.addf %102, %104 : vector<15x15xf32>
    %106 = arith.mulf %105, %105 : vector<15x15xf32>
    %107 = vector.shape_cast %106 : vector<15x15xf32> to vector<1x15x15xf32>
    %cst_20 = arith.constant dense<0.000000e+00> : vector<1xf32>
    %108 = vector.multi_reduction <add>, %107, %cst_20 [1, 2] : vector<1x15x15xf32> to vector<1xf32>
    %109 = vector.shape_cast %108 : vector<1xf32> to vector<1x1x1xf32>
    %110 = vector.extract %109[0, 0, 0] : f32 from vector<1x1x1xf32>
    %111 = arith.addf %95, %110 : f32
    %c7 = arith.constant 7 : index
    %c0_21 = arith.constant 0 : index
    %c0_22 = arith.constant 0 : index
    %112 = vector.load %arg1[%c7, %c0_21, %c0_22] : memref<8x16x16xf32, #tpu.memory_space<vmem>>, vector<1x16x16xf32>
    %113 = vector.shape_cast %112 : vector<1x16x16xf32> to vector<16x16xf32>
    %114 = vector.extract_strided_slice %113 {offsets = [0, 0], sizes = [15, 15], strides = [1, 1]} : vector<16x16xf32> to vector<15x15xf32>
    %115 = vector.extract_strided_slice %113 {offsets = [1, 0], sizes = [15, 15], strides = [1, 1]} : vector<16x16xf32> to vector<15x15xf32>
    %116 = vector.extract_strided_slice %113 {offsets = [0, 1], sizes = [15, 15], strides = [1, 1]} : vector<16x16xf32> to vector<15x15xf32>
    %117 = arith.subf %115, %114 : vector<15x15xf32>
    %118 = math.absf %117 : vector<15x15xf32>
    %119 = arith.subf %116, %114 : vector<15x15xf32>
    %120 = math.absf %119 : vector<15x15xf32>
    %121 = arith.addf %118, %120 : vector<15x15xf32>
    %122 = arith.mulf %121, %121 : vector<15x15xf32>
    %123 = vector.shape_cast %122 : vector<15x15xf32> to vector<1x15x15xf32>
    %cst_23 = arith.constant dense<0.000000e+00> : vector<1xf32>
    %124 = vector.multi_reduction <add>, %123, %cst_23 [1, 2] : vector<1x15x15xf32> to vector<1xf32>
    %125 = vector.shape_cast %124 : vector<1xf32> to vector<1x1x1xf32>
    %126 = vector.extract %125[0, 0, 0] : f32 from vector<1x1x1xf32>
    %127 = arith.addf %111, %126 : f32
    %c0_24 = arith.constant 0 : index
    %c0_25 = arith.constant 0 : index
    %128 = memref.load %arg2[%c0_24, %c0_25] : memref<1x1xf32, #tpu.memory_space<smem>>
    memref.store %127, %arg2[%c0_24, %c0_25] : memref<1x1xf32, #tpu.memory_space<smem>>
    return
  }
  func.func @transform_0(%arg0: i32) -> (i32, i32, i32) {
    %c0_i32 = arith.constant 0 : i32
    %c0_i32_0 = arith.constant 0 : i32
    %c0_i32_1 = arith.constant 0 : i32
    return %arg0, %c0_i32, %c0_i32_0 : i32, i32, i32
  }
  func.func @transform_1(%arg0: i32) -> (i32, i32) {
    %c0_i32 = arith.constant 0 : i32
    %c0_i32_0 = arith.constant 0 : i32
    return %arg0, %c0_i32 : i32, i32
  }
}

</mosaic_0001>

<llo_original>
// kernel: tpu_custom_call.1
$region0: #{tpu_custom_call.1}
  #allocation0 [shape = 'u32[]', space=smem, size = 0x4, offset = 0x4, fixed_abs, tag = 'smem constant byte address 0x4 - core index']
  #allocation1 [shape = 'u32[144,128]{1,0:T(1,128)}', space=vmem, size = 0x12000, scoped, tag = 'internal scratch']
  %s0 = inlined_call_operand.hbm [shape: f32[8,16,16], index: 0, kind: input, shape index: {}]
  %s1 = inlined_call_operand.hbm [shape: f32[1,1], index: 1, kind: output, shape index: {}]
  %s2 = sld [smem:[#allocation0]]
  $region18: #{tpu_custom_call.1} parent=0
    _
  %s4 = ssub.s32 1, %s2
  %s5 = scalar_select 0, %s4, %s2
  $region1: #{tpu_custom_call.1} parent=0
    #allocation2 [shape = 'u8[65536]{0}', space=vmem, size = 0x10000, scoped, tag = 'input window, operand 0, single buffered']
    #allocation3 [shape = 's32[1]{0}', space=sflag, size = 0x4, scoped, tag = 'scoped memory for tpu_custom_call.1']
    #allocation4 [shape = 's32[1]{0}', space=sflag, size = 0x4, scoped, tag = 'scoped memory for tpu_custom_call.1']
    #allocation5 [shape = 'u8[512]{0}', space=smem, size = 0x200, scoped, tag = 'output window, operand 0, single buffered']
    %6 = vsyncpa [#allocation3], 0
    %7 = vsyncpa [#allocation4], 0
    // Predicated region
    $region2: #{tpu_custom_call.1} parent=1 // pred_check
      _
    $region3: #{tpu_custom_call.1} parent=1 // pred_check_branch
      %9 = sbr.rel (0) target = $region5
    $region4: #{tpu_custom_call.1} parent=1 // pred_region
      %s11 = ssub.s32 2048, 2048
      %12 = vsyncadd [#allocation3], %s11
      %s13 = sshll.u32 [#allocation2], 4
      %s14 = int_to_ptr.vmem [resolvable:$true] %s13
      %19 = dma.hbm_to_vmem [thread:$0]  %s0, 2048, %s14, [#allocation3], 128, 128, 8
    $region5: #{tpu_custom_call.1} parent=1 // pred_fallthru
      _
    // Predicated region
    $region6: #{tpu_custom_call.1} parent=1 // pred_check
      _
    $region7: #{tpu_custom_call.1} parent=1 // pred_check_branch
      %21 = sbr.rel (0) target = $region9
    $region8: #{tpu_custom_call.1} parent=1 // pred_region
      %22 = dma.done [#allocation3], 2048
    $region9: #{tpu_custom_call.1} parent=1 // pred_fallthru
      _
    %v23 = vld [vmem:[#allocation2] sm:$0xff]
    %v24 = vld [vmem:[#allocation2 + $0x8] sm:$0xff]
    %vm27 = vcmask 1040384
    %v28 = vrot.slane %v23, 7
    %v29 = vrot.slane %v24, 7
    %v30 = vsel %vm27, %v28, %v29
    %v33 = vsub.f32 %v23, %v28
    %v34 = vsub.f32 %v24, %v30
    %v35 = vand.u32 2147483647, %v33
    %v36 = vand.u32 2147483647, %v34
    %37 = vrot.lane.b32.xlu0 %v23, 1
    %v38 = vpop.permute.xlu0 %37
    %39 = vrot.lane.b32.xlu0 %v24, 1
    %v40 = vpop.permute.xlu0 %39
    %v43 = vsub.f32 %v23, %v38
    %v44 = vsub.f32 %v24, %v40
    %v45 = vand.u32 2147483647, %v43
    %v46 = vand.u32 2147483647, %v44
    %v49 = vrot.slane %v45, 7
    %v50 = vrot.slane %v46, 7
    %v51 = vsel %vm27, %v49, %v50
    %52 = vrot.lane.b32.xlu0 %v49, 127
    %v53 = vpop.permute.xlu0 %52
    %54 = vrot.lane.b32.xlu0 %v51, 127
    %v55 = vpop.permute.xlu0 %54
    %v58 = vadd.f32 %v35, %v53
    %v59 = vadd.f32 %v36, %v55
    %v60 = vmul.f32 %v58, %v58
    %v61 = vmul.f32 %v59, %v59
    %vm64 = vcmask 1046528
    %v65 = vrot.slane %v60, 1
    %v66 = vrot.slane %v61, 1
    %v67 = vsel %vm64, %v65, %v66
    %vm70 = vcmask 121856
    %v71 = vsel %vm70, %v67, 0.0
    %vm72 = vcmask 120832
    %v73 = vsel %vm72, %v66, 0.0
    %v74 = vadd.f32 %v71, %v73
    %75 = vadd.xlane.f32.xlu0 %v74
    %v76 = vpop.xlane.xlu0 %75
    %v77 = vrot.slane %v76, 4
    %v78 = vadd.f32 %v76, %v77
    %v79 = vrot.slane %v78, 2
    %v80 = vadd.f32 %v78, %v79
    %v81 = vrot.slane %v80, 1
    %v82 = vadd.f32 %v80, %v81
    %s83 = vtos %v82
    %s84 = sadd.f32 %s83, 0.0
    %s85 = scalar_lea.vmem [#allocation2], 16
    %v86 = vld [vmem:[%s85] sm:$0xff]
    %v87 = vld [vmem:[%s85 + $0x8] sm:$0xff]
    %v90 = vrot.slane %v86, 7
    %v91 = vrot.slane %v87, 7
    %v92 = vsel %vm27, %v90, %v91
    %v95 = vsub.f32 %v86, %v90
    %v96 = vsub.f32 %v87, %v92
    %v97 = vand.u32 2147483647, %v95
    %v98 = vand.u32 2147483647, %v96
    %99 = vrot.lane.b32.xlu0 %v86, 1
    %v100 = vpop.permute.xlu0 %99
    %101 = vrot.lane.b32.xlu0 %v87, 1
    %v102 = vpop.permute.xlu0 %101
    %v105 = vsub.f32 %v86, %v100
    %v106 = vsub.f32 %v87, %v102
    %v107 = vand.u32 2147483647, %v105
    %v108 = vand.u32 2147483647, %v106
    %v111 = vrot.slane %v107, 7
    %v112 = vrot.slane %v108, 7
    %v113 = vsel %vm27, %v111, %v112
    %114 = vrot.lane.b32.xlu0 %v111, 127
    %v115 = vpop.permute.xlu0 %114
    %116 = vrot.lane.b32.xlu0 %v113, 127
    %v117 = vpop.permute.xlu0 %116
    %v120 = vadd.f32 %v97, %v115
    %v121 = vadd.f32 %v98, %v117
    %v122 = vmul.f32 %v120, %v120
    %v123 = vmul.f32 %v121, %v121
    %v126 = vrot.slane %v122, 1
    %v127 = vrot.slane %v123, 1
    %v128 = vsel %vm64, %v126, %v127
    %v131 = vsel %vm70, %v128, 0.0
    %v132 = vsel %vm72, %v127, 0.0
    %v133 = vadd.f32 %v131, %v132
    %134 = vadd.xlane.f32.xlu0 %v133
    %v135 = vpop.xlane.xlu0 %134
    %v136 = vrot.slane %v135, 4
    %v137 = vadd.f32 %v135, %v136
    %v138 = vrot.slane %v137, 2
    %v139 = vadd.f32 %v137, %v138
    %v140 = vrot.slane %v139, 1
    %v141 = vadd.f32 %v139, %v140
    %s142 = vtos %v141
    %s143 = sadd.f32 %s84, %s142
    %s144 = scalar_lea.vmem [#allocation2], 32
    %v145 = vld [vmem:[%s144] sm:$0xff]
    %v146 = vld [vmem:[%s144 + $0x8] sm:$0xff]
    %v149 = vrot.slane %v145, 7
    %v150 = vrot.slane %v146, 7
    %v151 = vsel %vm27, %v149, %v150
    %v154 = vsub.f32 %v145, %v149
    %v155 = vsub.f32 %v146, %v151
    %v156 = vand.u32 2147483647, %v154
    %v157 = vand.u32 2147483647, %v155
    %158 = vrot.lane.b32.xlu0 %v145, 1
    %v159 = vpop.permute.xlu0 %158
    %160 = vrot.lane.b32.xlu0 %v146, 1
    %v161 = vpop.permute.xlu0 %160
    %v164 = vsub.f32 %v145, %v159
    %v165 = vsub.f32 %v146, %v161
    %v166 = vand.u32 2147483647, %v164
    %v167 = vand.u32 2147483647, %v165
    %v170 = vrot.slane %v166, 7
    %v171 = vrot.slane %v167, 7
    %v172 = vsel %vm27, %v170, %v171
    %173 = vrot.lane.b32.xlu0 %v170, 127
    %v174 = vpop.permute.xlu0 %173
    %175 = vrot.lane.b32.xlu0 %v172, 127
    %v176 = vpop.permute.xlu0 %175
    %v179 = vadd.f32 %v156, %v174
    %v180 = vadd.f32 %v157, %v176
    %v181 = vmul.f32 %v179, %v179
    %v182 = vmul.f32 %v180, %v180
    %v185 = vrot.slane %v181, 1
    %v186 = vrot.slane %v182, 1
    %v187 = vsel %vm64, %v185, %v186
    %v190 = vsel %vm70, %v187, 0.0
    %v191 = vsel %vm72, %v186, 0.0
    %v192 = vadd.f32 %v190, %v191
    %193 = vadd.xlane.f32.xlu0 %v192
    %v194 = vpop.xlane.xlu0 %193
    %v195 = vrot.slane %v194, 4
    %v196 = vadd.f32 %v194, %v195
    %v197 = vrot.slane %v196, 2
    %v198 = vadd.f32 %v196, %v197
    %v199 = vrot.slane %v198, 1
    %v200 = vadd.f32 %v198, %v199
    %s201 = vtos %v200
    %s202 = sadd.f32 %s143, %s201
    %s203 = scalar_lea.vmem [#allocation2], 48
    %v204 = vld [vmem:[%s203] sm:$0xff]
    %v205 = vld [vmem:[%s203 + $0x8] sm:$0xff]
    %v208 = vrot.slane %v204, 7
    %v209 = vrot.slane %v205, 7
    %v210 = vsel %vm27, %v208, %v209
    %v213 = vsub.f32 %v204, %v208
    %v214 = vsub.f32 %v205, %v210
    %v215 = vand.u32 2147483647, %v213
    %v216 = vand.u32 2147483647, %v214
    %217 = vrot.lane.b32.xlu0 %v204, 1
    %v218 = vpop.permute.xlu0 %217
    %219 = vrot.lane.b32.xlu0 %v205, 1
    %v220 = vpop.permute.xlu0 %219
    %v223 = vsub.f32 %v204, %v218
    %v224 = vsub.f32 %v205, %v220
    %v225 = vand.u32 2147483647, %v223
    %v226 = vand.u32 2147483647, %v224
    %v229 = vrot.slane %v225, 7
    %v230 = vrot.slane %v226, 7
    %v231 = vsel %vm27, %v229, %v230
    %232 = vrot.lane.b32.xlu0 %v229, 127
    %v233 = vpop.permute.xlu0 %232
    %234 = vrot.lane.b32.xlu0 %v231, 127
    %v235 = vpop.permute.xlu0 %234
    %v238 = vadd.f32 %v215, %v233
    %v239 = vadd.f32 %v216, %v235
    %v240 = vmul.f32 %v238, %v238
    %v241 = vmul.f32 %v239, %v239
    %v244 = vrot.slane %v240, 1
    %v245 = vrot.slane %v241, 1
    %v246 = vsel %vm64, %v244, %v245
    %v249 = vsel %vm70, %v246, 0.0
    %v250 = vsel %vm72, %v245, 0.0
    %v251 = vadd.f32 %v249, %v250
    %252 = vadd.xlane.f32.xlu0 %v251
    %v253 = vpop.xlane.xlu0 %252
    %v254 = vrot.slane %v253, 4
    %v255 = vadd.f32 %v253, %v254
    %v256 = vrot.slane %v255, 2
    %v257 = vadd.f32 %v255, %v256
    %v258 = vrot.slane %v257, 1
    %v259 = vadd.f32 %v257, %v258
    %s260 = vtos %v259
    %s261 = sadd.f32 %s202, %s260
    %s262 = scalar_lea.vmem [#allocation2], 64
    %v263 = vld [vmem:[%s262] sm:$0xff]
    %v264 = vld [vmem:[%s262 + $0x8] sm:$0xff]
    %v267 = vrot.slane %v263, 7
    %v268 = vrot.slane %v264, 7
    %v269 = vsel %vm27, %v267, %v268
    %v272 = vsub.f32 %v263, %v267
    %v273 = vsub.f32 %v264, %v269
    %v274 = vand.u32 2147483647, %v272
    %v275 = vand.u32 2147483647, %v273
    %276 = vrot.lane.b32.xlu0 %v263, 1
    %v277 = vpop.permute.xlu0 %276
    %278 = vrot.lane.b32.xlu0 %v264, 1
    %v279 = vpop.permute.xlu0 %278
    %v282 = vsub.f32 %v263, %v277
    %v283 = vsub.f32 %v264, %v279
    %v284 = vand.u32 2147483647, %v282
    %v285 = vand.u32 2147483647, %v283
    %v288 = vrot.slane %v284, 7
    %v289 = vrot.slane %v285, 7
    %v290 = vsel %vm27, %v288, %v289
    %291 = vrot.lane.b32.xlu0 %v288, 127
    %v292 = vpop.permute.xlu0 %291
    %293 = vrot.lane.b32.xlu0 %v290, 127
    %v294 = vpop.permute.xlu0 %293
    %v297 = vadd.f32 %v274, %v292
    %v298 = vadd.f32 %v275, %v294
    %v299 = vmul.f32 %v297, %v297
    %v300 = vmul.f32 %v298, %v298
    %v303 = vrot.slane %v299, 1
    %v304 = vrot.slane %v300, 1
    %v305 = vsel %vm64, %v303, %v304
    %v308 = vsel %vm70, %v305, 0.0
    %v309 = vsel %vm72, %v304, 0.0
    %v310 = vadd.f32 %v308, %v309
    %311 = vadd.xlane.f32.xlu0 %v310
    %v312 = vpop.xlane.xlu0 %311
    %v313 = vrot.slane %v312, 4
    %v314 = vadd.f32 %v312, %v313
    %v315 = vrot.slane %v314, 2
    %v316 = vadd.f32 %v314, %v315
    %v317 = vrot.slane %v316, 1
    %v318 = vadd.f32 %v316, %v317
    %s319 = vtos %v318
    %s320 = sadd.f32 %s261, %s319
    %s321 = scalar_lea.vmem [#allocation2], 80
    %v322 = vld [vmem:[%s321] sm:$0xff]
    %v323 = vld [vmem:[%s321 + $0x8] sm:$0xff]
    %v326 = vrot.slane %v322, 7
    %v327 = vrot.slane %v323, 7
    %v328 = vsel %vm27, %v326, %v327
    %v331 = vsub.f32 %v322, %v326
    %v332 = vsub.f32 %v323, %v328
    %v333 = vand.u32 2147483647, %v331
    %v334 = vand.u32 2147483647, %v332
    %335 = vrot.lane.b32.xlu0 %v322, 1
    %v336 = vpop.permute.xlu0 %335
    %337 = vrot.lane.b32.xlu0 %v323, 1
    %v338 = vpop.permute.xlu0 %337
    %v341 = vsub.f32 %v322, %v336
    %v342 = vsub.f32 %v323, %v338
    %v343 = vand.u32 2147483647, %v341
    %v344 = vand.u32 2147483647, %v342
    %v347 = vrot.slane %v343, 7
    %v348 = vrot.slane %v344, 7
    %v349 = vsel %vm27, %v347, %v348
    %350 = vrot.lane.b32.xlu0 %v347, 127
    %v351 = vpop.permute.xlu0 %350
    %352 = vrot.lane.b32.xlu0 %v349, 127
    %v353 = vpop.permute.xlu0 %352
    %v356 = vadd.f32 %v333, %v351
    %v357 = vadd.f32 %v334, %v353
    %v358 = vmul.f32 %v356, %v356
    %v359 = vmul.f32 %v357, %v357
    %v362 = vrot.slane %v358, 1
    %v363 = vrot.slane %v359, 1
    %v364 = vsel %vm64, %v362, %v363
    %v367 = vsel %vm70, %v364, 0.0
    %v368 = vsel %vm72, %v363, 0.0
    %v369 = vadd.f32 %v367, %v368
    %370 = vadd.xlane.f32.xlu0 %v369
    %v371 = vpop.xlane.xlu0 %370
    %v372 = vrot.slane %v371, 4
    %v373 = vadd.f32 %v371, %v372
    %v374 = vrot.slane %v373, 2
    %v375 = vadd.f32 %v373, %v374
    %v376 = vrot.slane %v375, 1
    %v377 = vadd.f32 %v375, %v376
    %s378 = vtos %v377
    %s379 = sadd.f32 %s320, %s378
    %s380 = scalar_lea.vmem [#allocation2], 96
    %v381 = vld [vmem:[%s380] sm:$0xff]
    %v382 = vld [vmem:[%s380 + $0x8] sm:$0xff]
    %v385 = vrot.slane %v381, 7
    %v386 = vrot.slane %v382, 7
    %v387 = vsel %vm27, %v385, %v386
    %v390 = vsub.f32 %v381, %v385
    %v391 = vsub.f32 %v382, %v387
    %v392 = vand.u32 2147483647, %v390
    %v393 = vand.u32 2147483647, %v391
    %394 = vrot.lane.b32.xlu0 %v381, 1
    %v395 = vpop.permute.xlu0 %394
    %396 = vrot.lane.b32.xlu0 %v382, 1
    %v397 = vpop.permute.xlu0 %396
    %v400 = vsub.f32 %v381, %v395
    %v401 = vsub.f32 %v382, %v397
    %v402 = vand.u32 2147483647, %v400
    %v403 = vand.u32 2147483647, %v401
    %v406 = vrot.slane %v402, 7
    %v407 = vrot.slane %v403, 7
    %v408 = vsel %vm27, %v406, %v407
    %409 = vrot.lane.b32.xlu0 %v406, 127
    %v410 = vpop.permute.xlu0 %409
    %411 = vrot.lane.b32.xlu0 %v408, 127
    %v412 = vpop.permute.xlu0 %411
    %v415 = vadd.f32 %v392, %v410
    %v416 = vadd.f32 %v393, %v412
    %v417 = vmul.f32 %v415, %v415
    %v418 = vmul.f32 %v416, %v416
    %v421 = vrot.slane %v417, 1
    %v422 = vrot.slane %v418, 1
    %v423 = vsel %vm64, %v421, %v422
    %v426 = vsel %vm70, %v423, 0.0
    %v427 = vsel %vm72, %v422, 0.0
    %v428 = vadd.f32 %v426, %v427
    %429 = vadd.xlane.f32.xlu0 %v428
    %v430 = vpop.xlane.xlu0 %429
    %v431 = vrot.slane %v430, 4
    %v432 = vadd.f32 %v430, %v431
    %v433 = vrot.slane %v432, 2
    %v434 = vadd.f32 %v432, %v433
    %v435 = vrot.slane %v434, 1
    %v436 = vadd.f32 %v434, %v435
    %s437 = vtos %v436
    %s438 = sadd.f32 %s379, %s437
    %s439 = scalar_lea.vmem [#allocation2], 112
    %v440 = vld [vmem:[%s439] sm:$0xff]
    %v441 = vld [vmem:[%s439 + $0x8] sm:$0xff]
    %v444 = vrot.slane %v440, 7
    %v445 = vrot.slane %v441, 7
    %v446 = vsel %vm27, %v444, %v445
    %v449 = vsub.f32 %v440, %v444
    %v450 = vsub.f32 %v441, %v446
    %v451 = vand.u32 2147483647, %v449
    %v452 = vand.u32 2147483647, %v450
    %453 = vrot.lane.b32.xlu0 %v440, 1
    %v454 = vpop.permute.xlu0 %453
    %455 = vrot.lane.b32.xlu0 %v441, 1
    %v456 = vpop.permute.xlu0 %455
    %v459 = vsub.f32 %v440, %v454
    %v460 = vsub.f32 %v441, %v456
    %v461 = vand.u32 2147483647, %v459
    %v462 = vand.u32 2147483647, %v460
    %v465 = vrot.slane %v461, 7
    %v466 = vrot.slane %v462, 7
    %v467 = vsel %vm27, %v465, %v466
    %468 = vrot.lane.b32.xlu0 %v465, 127
    %v469 = vpop.permute.xlu0 %468
    %470 = vrot.lane.b32.xlu0 %v467, 127
    %v471 = vpop.permute.xlu0 %470
    %v474 = vadd.f32 %v451, %v469
    %v475 = vadd.f32 %v452, %v471
    %v476 = vmul.f32 %v474, %v474
    %v477 = vmul.f32 %v475, %v475
    %v480 = vrot.slane %v476, 1
    %v481 = vrot.slane %v477, 1
    %v482 = vsel %vm64, %v480, %v481
    %v485 = vsel %vm70, %v482, 0.0
    %v486 = vsel %vm72, %v481, 0.0
    %v487 = vadd.f32 %v485, %v486
    %488 = vadd.xlane.f32.xlu0 %v487
    %v489 = vpop.xlane.xlu0 %488
    %v490 = vrot.slane %v489, 4
    %v491 = vadd.f32 %v489, %v490
    %v492 = vrot.slane %v491, 2
    %v493 = vadd.f32 %v491, %v492
    %v494 = vrot.slane %v493, 1
    %v495 = vadd.f32 %v493, %v494
    %s496 = vtos %v495
    %s497 = sadd.f32 %s438, %s496
    %s498 = scalar_lea.smem [#allocation5], 0
    %499 = sst [smem:[%s498]] %s497
    // Predicated region
    $region10: #{tpu_custom_call.1} parent=1 // pred_check
      _
    $region11: #{tpu_custom_call.1} parent=1 // pred_check_branch
      %501 = sbr.rel (0) target = $region13
    $region12: #{tpu_custom_call.1} parent=1 // pred_region
      %s503 = ssub.s32 16, 16
      %504 = vsyncadd [#allocation4], %s503
      %507 = dma.smem_to_hbm [#allocation5], 16, %s1, [#allocation4]
    $region13: #{tpu_custom_call.1} parent=1 // pred_fallthru
      _
    // Predicated region
    $region14: #{tpu_custom_call.1} parent=1 // pred_check
      _
    $region15: #{tpu_custom_call.1} parent=1 // pred_check_branch
      %509 = sbr.rel (0) target = $region17
    $region16: #{tpu_custom_call.1} parent=1 // pred_region
      %510 = dma.done [#allocation4], 16
    $region17: #{tpu_custom_call.1} parent=1 // pred_fallthru
      _
    %511 = sfence
    %512 = vsyncpa [#allocation3], 1
    %513 = vsyncpa [#allocation4], 1

</llo_original>
